<compile_context>
chip_gen: v7x
topology: tpu7x:2x2x1
jax: 0.10.0
libtpu: 0.0.40
codegen_flags: <defaults>
</compile_context>

<pallas_src>
import functools

import numpy as np
import jax
import jax.numpy as jnp
from jax.experimental import pallas as pl
from jax.experimental.pallas import tpu as pltpu


def _make_kernel(weight, margin, size_average, tm, npad):
    weight = float(weight)
    margin = float(margin)

    def kernel(p_full_ref, l_full_ref, p_tile_ref, l_tile_ref,
               loss_ref, num_ref, rank_ref):
        t = pl.program_id(0)
        nt = pl.num_programs(0)

        @pl.when(t == 0)
        def _init():
            rank_ref[...] = jnp.zeros_like(rank_ref)

        p_full = p_full_ref[...]            # (1, Np) f32 logits (resident)
        p_tile = p_tile_ref[...]            # (1, TM) f32 logits of this row tile
        l_tile = l_tile_ref[...]            # (1, TM) f32 labels of this row tile

        # ---- (TM, 1) column view of the tile logits (no transpose/relayout):
        # select the diagonal of the sublane-broadcast tile and row-reduce.
        sub = jax.lax.broadcasted_iota(jnp.int32, (tm, tm), 0)
        lane = jax.lax.broadcasted_iota(jnp.int32, (tm, tm), 1)
        p_col = jnp.sum(jnp.where(sub == lane, p_tile, 0.0),
                        axis=1, keepdims=True)                    # (TM, 1)

        # Global element indices for the tie-break (stable sort order).
        j_idx = t * tm + jax.lax.broadcasted_iota(jnp.int32, (tm, 1), 0)  # (TM,1)
        i_idx = jax.lax.broadcasted_iota(jnp.int32, (1, npad), 1)         # (1,Np)

        # before[jj, i] = 1 iff element j = t*TM+jj strictly precedes element i
        # in (value, index) lexicographic order.
        before = (p_col < p_full) | ((p_col == p_full) & (j_idx < i_idx))  # (TM,Np)

        # rank_i += #{ negative j in this tile : j precedes i }   (MXU mat-vec)
        neg_tile = (l_tile == 0.0).astype(jnp.float32)             # (1, TM)
        rank_ref[...] += jnp.dot(neg_tile, before.astype(jnp.float32),
                                 preferred_element_type=jnp.float32)  # (1, Np)

        @pl.when(t == nt - 1)
        def _finalize():
            x = p_full
            l = l_full_ref[...]                                    # (1, Np)
            pos = (l > 0.0).astype(jnp.float32)
            neg = (l == 0.0).astype(jnp.float32)                   # padding: -1 -> 0
            num_pos = jnp.sum(pos, axis=1, keepdims=True)          # (1, 1)
            num_neg = jnp.sum(neg, axis=1, keepdims=True)          # (1, 1)
            top_m = jnp.minimum(num_pos, num_neg) - 1.0
            use_clean = top_m > 0.0

            # Keep the topM lowest-logit negatives (rank < topM), else all negs.
            keep = (rank_ref[...] < top_m).astype(jnp.float32)     # (1, Np)
            sel = pos + jnp.where(use_clean, neg * keep, neg)

            # Numerically stable BCE-with-logits, lane-dense.
            bce = (jnp.maximum(x, 0.0) - x * l
                   + jnp.log(1.0 + jnp.exp(-jnp.abs(x))))
            loss_bce = jnp.sum(sel * bce, axis=1, keepdims=True)   # (1, 1)
            if size_average:
                n_sel = jnp.sum(sel, axis=1, keepdims=True)
                loss_bce = loss_bce * pl.reciprocal(
                    jnp.maximum(n_sel, 1.0), approx=True)

            # Ranking term over the full (uncleaned) negatives / positives.
            neg_inf = jnp.float32(-jnp.inf)
            neg_max = jnp.max(jnp.where(neg > 0.0, x, neg_inf),
                              axis=1, keepdims=True)
            pos_max = jnp.max(jnp.where(pos > 0.0, x, neg_inf),
                              axis=1, keepdims=True)
            rank_loss = jnp.maximum(0.0, margin - neg_max + pos_max)
            loss_rank = jnp.where(use_clean, rank_loss, 0.0)

            loss_ref[...] = loss_bce + weight * loss_rank
            num_ref[...] = (num_pos
                            + jnp.where(use_clean, top_m, num_neg)).astype(jnp.int32)

    return kernel


def _pick_tile(npad):
    # Largest row tile that divides Np and keeps per-step (TM, Np) f32
    # intermediates comfortably inside scoped VMEM on all generations.
    for tm in (512, 256, 128):
        if npad % tm == 0 and tm * npad <= 1_048_576:
            return tm
    return 128


@functools.partial(jax.jit, static_argnames=("weight", "margin", "size_average"))
def actionness_loss(logit, target, *, weight=0.1, margin=1.0, size_average=False):
    """Returns (loss_total, num_pos + num_neg) like the PyTorch module."""
    p = logit.reshape(-1).astype(jnp.float32)
    l = target.reshape(-1).astype(jnp.float32)
    n = p.shape[0]
    npad = ((n + 127) // 128) * 128
    pad = npad - n
    # Lane-dense rows; padded labels = -1 (neither positive nor negative).
    p_row = jnp.pad(p, (0, pad)).reshape(1, npad)
    l_row = jnp.pad(l, (0, pad), constant_values=-1.0).reshape(1, npad)

    tm = _pick_tile(npad)
    grid = (npad // tm,)
    kernel = _make_kernel(weight, margin, size_average, tm, npad)

    full_spec = pl.BlockSpec((1, npad), lambda t: (0, 0))    # resident rows
    tile_spec = pl.BlockSpec((1, tm), lambda t: (0, t))      # per-step row tile
    scalar_spec = pl.BlockSpec((1, 1), lambda t: (0, 0))

    loss, num = pl.pallas_call(
        kernel,
        out_shape=(jax.ShapeDtypeStruct((1, 1), jnp.float32),
                   jax.ShapeDtypeStruct((1, 1), jnp.int32)),
        grid_spec=pltpu.PrefetchScalarGridSpec(
            num_scalar_prefetch=0,
            grid=grid,
            # p/l are each passed twice (resident full row + tiled view of the
            # SAME HBM array) -- no transposed/duplicated copies are created.
            in_specs=[full_spec, full_spec, tile_spec, tile_spec],
            out_specs=(scalar_spec, scalar_spec),
            scratch_shapes=[pltpu.VMEM((1, npad), jnp.float32)]),
        compiler_params=pltpu.CompilerParams(
            dimension_semantics=("arbitrary",),
            vmem_limit_bytes=64 * 1024 * 1024),
    )(p_row, l_row, p_row, l_row)
    return loss[0, 0], num[0, 0]


def _reference_numpy(logit, target, weight=0.1, margin=1.0, size_average=False):
    pred = np.asarray(logit, np.float64).reshape(-1)
    label = np.asarray(target, np.float64).reshape(-1)
    pos = pred[label > 0]
    pos_l = label[label > 0]
    neg = pred[label == 0]
    neg_l = label[label == 0]
    num_pos, num_neg = pos.size, neg.size
    top_m = min(num_pos, num_neg) - 1
    if top_m > 0:
        order = np.argsort(neg, kind="stable")
        sel_p = np.concatenate([pos, neg[order[:top_m]]])
        sel_l = np.concatenate([pos_l, neg_l[order[:top_m]]])
        num_neg = top_m
    else:
        sel_p = np.concatenate([pos, neg])
        sel_l = np.concatenate([pos_l, neg_l])
    bce = np.maximum(sel_p, 0) - sel_p * sel_l + np.log1p(np.exp(-np.abs(sel_p)))
    loss_bce = bce.mean() if size_average else bce.sum()
    loss_rank = 0.0
    if top_m > 0:
        loss_rank = max(0.0, margin - neg.max() + pos.max())
    return loss_bce + weight * loss_rank, num_pos + num_neg


if __name__ == "__main__":
    key = jax.random.PRNGKey(0)
    k1, k2, k3, k4 = jax.random.split(key, 4)

    # Case 1: single grid step (N=64 -> Np=128).
    logit1 = jax.random.normal(k1, (64, 1), dtype=jnp.float32)
    target1 = (jax.random.uniform(k2, (64, 1)) > 0.5).astype(jnp.float32)

    # Case 2: multi-step grid with padding (N=300 -> Np=384, TM=128, 3 steps).
    logit2 = jax.random.normal(k3, (300, 1), dtype=jnp.float32)
    target2 = (jax.random.uniform(k4, (300, 1)) > 0.4).astype(jnp.float32)

    # Case 3: topM <= 0 branch (only one negative sample).
    target3 = jnp.ones((64, 1), jnp.float32).at[7, 0].set(0.0)

    cases = [
        (logit1, target1, False, 1e-4),
        (logit2, target2, False, 1e-4),
        (logit1, target3, False, 1e-4),
        (logit2, target2, True, 2e-3),   # mean path uses approx reciprocal
    ]

    for lg, tg, size_avg, tol in cases:
        loss, num = actionness_loss(lg, tg, size_average=size_avg)
        loss = jax.block_until_ready(loss)
        num = jax.block_until_ready(num)
        ref_loss, ref_num = _reference_numpy(np.asarray(lg), np.asarray(tg),
                                             size_average=size_avg)
        np.testing.assert_allclose(float(loss), float(ref_loss), rtol=tol, atol=tol)
        assert int(num) == int(ref_num), (int(num), int(ref_num))

    print("KERNEL_OK")
</pallas_src>

<mosaic_0001>
module attributes {stable_mosaic.version = 11 : i64} {
  func.func @kernel(%arg0: i32, %arg1: memref<1x128xf32, #tpu.memory_space<vmem>>, %arg2: memref<1x128xf32, #tpu.memory_space<vmem>>, %arg3: memref<1x128xf32, #tpu.memory_space<vmem>>, %arg4: memref<1x128xf32, #tpu.memory_space<vmem>>, %arg5: memref<1x1xf32, #tpu.memory_space<vmem>>, %arg6: memref<1x1xi32, #tpu.memory_space<vmem>>, %arg7: memref<1x128xf32, #tpu.memory_space<vmem>>) attributes {dimension_semantics = [#tpu.dimension_semantics<arbitrary>], iteration_bounds = array<i64: 1>, scalar_prefetch = 0 : i64, scratch_operands = 1 : i64, tpu.core_type = #tpu.core_type<tc>, window_params = [{pipeline_mode = #tpu.pipeline_mode<synchronous>, transform_indices = @transform_0, window_bounds = array<i64: 1, 128>}, {pipeline_mode = #tpu.pipeline_mode<synchronous>, transform_indices = @transform_1, window_bounds = array<i64: 1, 128>}, {transform_indices = @transform_2, window_bounds = array<i64: 1, 128>}, {transform_indices = @transform_3, window_bounds = array<i64: 1, 128>}, {pipeline_mode = #tpu.pipeline_mode<synchronous>, transform_indices = @transform_4, window_bounds = array<i64: 1, 1>}, {pipeline_mode = #tpu.pipeline_mode<synchronous>, transform_indices = @transform_5, window_bounds = array<i64: 1, 1>}]} {
    %c0_i32 = arith.constant 0 : i32
    %0 = arith.cmpi eq, %arg0, %c0_i32 : i32
    %1 = arith.extui %0 : i1 to i32
    %c0_i32_0 = arith.constant 0 : i32
    %2 = arith.cmpi ne, %1, %c0_i32_0 : i32
    scf.if %2 {
      %cst_15 = arith.constant 0.000000e+00 : f32
      %44 = vector.broadcast %cst_15 : f32 to vector<1x128xf32>
      %c0_16 = arith.constant 0 : index
      %c0_17 = arith.constant 0 : index
      %45 = vector.load %arg7[%c0_16, %c0_17] : memref<1x128xf32, #tpu.memory_space<vmem>>, vector<1x128xf32>
      tpu.vector_store %arg7[%c0_16, %c0_17], %44 {strides = array<i32>} : memref<1x128xf32, #tpu.memory_space<vmem>>, vector<1x128xf32>,
    } else {
    }
    %c0 = arith.constant 0 : index
    %c0_1 = arith.constant 0 : index
    %3 = vector.load %arg1[%c0, %c0_1] : memref<1x128xf32, #tpu.memory_space<vmem>>, vector<1x128xf32>
    %c0_2 = arith.constant 0 : index
    %c0_3 = arith.constant 0 : index
    %4 = vector.load %arg3[%c0_2, %c0_3] : memref<1x128xf32, #tpu.memory_space<vmem>>, vector<1x128xf32>
    %c0_4 = arith.constant 0 : index
    %c0_5 = arith.constant 0 : index
    %5 = vector.load %arg4[%c0_4, %c0_5] : memref<1x128xf32, #tpu.memory_space<vmem>>, vector<1x128xf32>
    %6 = tpu.iota {dimensions = array<i32: 0>} : vector<128x128xi32>
    %7 = tpu.iota {dimensions = array<i32: 1>} : vector<128x128xi32>
    %8 = arith.cmpi eq, %6, %7 : vector<128x128xi32>
    %cst = arith.constant 0.000000e+00 : f32
    %9 = vector.shape_cast %4 : vector<1x128xf32> to vector<1x128xf32>
    %10 = vector.broadcast %9 : vector<1x128xf32> to vector<128x128xf32>
    %11 = vector.broadcast %cst : f32 to vector<128x128xf32>
    %12 = arith.select %8, %10, %11 : vector<128x128xi1>, vector<128x128xf32>
    %cst_6 = arith.constant dense<0.000000e+00> : vector<128xf32>
    %13 = vector.multi_reduction <add>, %12, %cst_6 [1] : vector<128x128xf32> to vector<128xf32>
    %14 = vector.shape_cast %13 : vector<128xf32> to vector<128x1xf32>
    %c128_i32 = arith.constant 128 : i32
    %15 = arith.muli %arg0, %c128_i32 : i32
    %16 = tpu.iota {dimensions = array<i32: 0>} : vector<128x1xi32>
    %17 = vector.broadcast %15 : i32 to vector<128x1xi32>
    %18 = arith.addi %17, %16 : vector<128x1xi32>
    %19 = tpu.iota {dimensions = array<i32: 1>} : vector<1x128xi32>
    %20 = vector.broadcast %14 : vector<128x1xf32> to vector<128x128xf32>
    %21 = vector.broadcast %3 : vector<1x128xf32> to vector<128x128xf32>
    %22 = arith.cmpf olt, %20, %21 : vector<128x128xf32>
    %23 = vector.broadcast %14 : vector<128x1xf32> to vector<128x128xf32>
    %24 = vector.broadcast %3 : vector<1x128xf32> to vector<128x128xf32>
    %25 = arith.cmpf oeq, %23, %24 : vector<128x128xf32>
    %26 = vector.broadcast %18 : vector<128x1xi32> to vector<128x128xi32>
    %27 = vector.broadcast %19 : vector<1x128xi32> to vector<128x128xi32>
    %28 = arith.cmpi slt, %26, %27 : vector<128x128xi32>
    %29 = arith.andi %25, %28 : vector<128x128xi1>
    %30 = arith.ori %22, %29 : vector<128x128xi1>
    %cst_7 = arith.constant 0.000000e+00 : f32
    %31 = vector.broadcast %cst_7 : f32 to vector<1x128xf32>
    %32 = arith.cmpf oeq, %5, %31 : vector<1x128xf32>
    %33 = arith.extui %32 : vector<1x128xi1> to vector<1x128xi32>
    %34 = arith.sitofp %33 : vector<1x128xi32> to vector<1x128xf32>
    %c0_8 = arith.constant 0 : index
    %c0_9 = arith.constant 0 : index
    %35 = vector.load %arg7[%c0_8, %c0_9] : memref<1x128xf32, #tpu.memory_space<vmem>>, vector<1x128xf32>
    %36 = arith.extui %30 : vector<128x128xi1> to vector<128x128xi32>
    %37 = arith.sitofp %36 : vector<128x128xi32> to vector<128x128xf32>
    %cst_10 = arith.constant dense<0.000000e+00> : vector<1x128xf32>
    %38 = tpu.matmul %34, %37, %cst_10 {dimension_numbers = #tpu.dot_dimension_numbers<[1], [0], [0], [1], [0, 0, 1, 1], [], []>} : vector<1x128xf32>, vector<128x128xf32>, vector<1x128xf32> -> vector<1x128xf32>
    %39 = arith.addf %35, %38 : vector<1x128xf32>
    %c0_11 = arith.constant 0 : index
    %c0_12 = arith.constant 0 : index
    %40 = vector.load %arg7[%c0_11, %c0_12] : memref<1x128xf32, #tpu.memory_space<vmem>>, vector<1x128xf32>
    tpu.vector_store %arg7[%c0_11, %c0_12], %39 {strides = array<i32>} : memref<1x128xf32, #tpu.memory_space<vmem>>, vector<1x128xf32>,
    %c0_i32_13 = arith.constant 0 : i32
    %41 = arith.cmpi eq, %arg0, %c0_i32_13 : i32
    %42 = arith.extui %41 : i1 to i32
    %c0_i32_14 = arith.constant 0 : i32
    %43 = arith.cmpi ne, %42, %c0_i32_14 : i32
    scf.if %43 {
      %c0_15 = arith.constant 0 : index
      %c0_16 = arith.constant 0 : index
      %44 = vector.load %arg2[%c0_15, %c0_16] : memref<1x128xf32, #tpu.memory_space<vmem>>, vector<1x128xf32>
      %cst_17 = arith.constant 0.000000e+00 : f32
      %45 = vector.broadcast %cst_17 : f32 to vector<1x128xf32>
      %46 = arith.cmpf ogt, %44, %45 : vector<1x128xf32>
      %47 = arith.extui %46 : vector<1x128xi1> to vector<1x128xi32>
      %48 = arith.sitofp %47 : vector<1x128xi32> to vector<1x128xf32>
      %cst_18 = arith.constant 0.000000e+00 : f32
      %49 = vector.broadcast %cst_18 : f32 to vector<1x128xf32>
      %50 = arith.cmpf oeq, %44, %49 : vector<1x128xf32>
      %51 = arith.extui %50 : vector<1x128xi1> to vector<1x128xi32>
      %52 = arith.sitofp %51 : vector<1x128xi32> to vector<1x128xf32>
      %cst_19 = arith.constant dense<0.000000e+00> : vector<1xf32>
      %53 = vector.multi_reduction <add>, %48, %cst_19 [1] : vector<1x128xf32> to vector<1xf32>
      %54 = vector.shape_cast %53 : vector<1xf32> to vector<1x1xf32>
      %cst_20 = arith.constant dense<0.000000e+00> : vector<1xf32>
      %55 = vector.multi_reduction <add>, %52, %cst_20 [1] : vector<1x128xf32> to vector<1xf32>
      %56 = vector.shape_cast %55 : vector<1xf32> to vector<1x1xf32>
      %57 = arith.minimumf %54, %56 : vector<1x1xf32>
      %cst_21 = arith.constant 1.000000e+00 : f32
      %58 = vector.broadcast %cst_21 : f32 to vector<1x1xf32>
      %59 = arith.subf %57, %58 : vector<1x1xf32>
      %cst_22 = arith.constant 0.000000e+00 : f32
      %60 = vector.broadcast %cst_22 : f32 to vector<1x1xf32>
      %61 = arith.cmpf ogt, %59, %60 : vector<1x1xf32>
      %c0_23 = arith.constant 0 : index
      %c0_24 = arith.constant 0 : index
      %62 = vector.load %arg7[%c0_23, %c0_24] : memref<1x128xf32, #tpu.memory_space<vmem>>, vector<1x128xf32>
      %63 = vector.broadcast %59 : vector<1x1xf32> to vector<1x128xf32>
      %64 = arith.cmpf olt, %62, %63 : vector<1x128xf32>
      %65 = arith.extui %64 : vector<1x128xi1> to vector<1x128xi32>
      %66 = arith.sitofp %65 : vector<1x128xi32> to vector<1x128xf32>
      %67 = arith.mulf %52, %66 : vector<1x128xf32>
      %68 = vector.shape_cast %61 : vector<1x1xi1> to vector<1x1xi1>
      %69 = vector.broadcast %68 : vector<1x1xi1> to vector<1x128xi1>
      %70 = arith.select %69, %67, %52 : vector<1x128xi1>, vector<1x128xf32>
      %71 = arith.addf %48, %70 : vector<1x128xf32>
      %cst_25 = arith.constant 0.000000e+00 : f32
      %72 = vector.broadcast %cst_25 : f32 to vector<1x128xf32>
      %73 = arith.maximumf %3, %72 : vector<1x128xf32>
      %74 = arith.mulf %3, %44 : vector<1x128xf32>
      %75 = arith.subf %73, %74 : vector<1x128xf32>
      %76 = math.absf %3 : vector<1x128xf32>
      %cst_26 = arith.constant 0.000000e+00 : f32
      %77 = vector.broadcast %cst_26 : f32 to vector<1x128xf32>
      %78 = arith.subf %77, %76 : vector<1x128xf32>
      %79 = math.exp %78 : vector<1x128xf32>
      %cst_27 = arith.constant 1.000000e+00 : f32
      %80 = vector.broadcast %cst_27 : f32 to vector<1x128xf32>
      %81 = arith.addf %80, %79 : vector<1x128xf32>
      %82 = math.log %81 : vector<1x128xf32>
      %83 = arith.addf %75, %82 : vector<1x128xf32>
      %84 = arith.mulf %71, %83 : vector<1x128xf32>
      %cst_28 = arith.constant dense<0.000000e+00> : vector<1xf32>
      %85 = vector.multi_reduction <add>, %84, %cst_28 [1] : vector<1x128xf32> to vector<1xf32>
      %86 = vector.shape_cast %85 : vector<1xf32> to vector<1x1xf32>
      %cst_29 = arith.constant 0.000000e+00 : f32
      %87 = vector.broadcast %cst_29 : f32 to vector<1x128xf32>
      %88 = arith.cmpf ogt, %52, %87 : vector<1x128xf32>
      %cst_30 = arith.constant 0xFF800000 : f32
      %89 = vector.broadcast %cst_30 : f32 to vector<1x128xf32>
      %90 = arith.select %88, %3, %89 : vector<1x128xi1>, vector<1x128xf32>
      %cst_31 = arith.constant dense<0xFF800000> : vector<1xf32>
      %91 = vector.multi_reduction <maximumf>, %90, %cst_31 [1] : vector<1x128xf32> to vector<1xf32>
      %92 = vector.shape_cast %91 : vector<1xf32> to vector<1x1xf32>
      %cst_32 = arith.constant 0.000000e+00 : f32
      %93 = vector.broadcast %cst_32 : f32 to vector<1x128xf32>
      %94 = arith.cmpf ogt, %48, %93 : vector<1x128xf32>
      %cst_33 = arith.constant 0xFF800000 : f32
      %95 = vector.broadcast %cst_33 : f32 to vector<1x128xf32>
      %96 = arith.select %94, %3, %95 : vector<1x128xi1>, vector<1x128xf32>
      %cst_34 = arith.constant dense<0xFF800000> : vector<1xf32>
      %97 = vector.multi_reduction <maximumf>, %96, %cst_34 [1] : vector<1x128xf32> to vector<1xf32>
      %98 = vector.shape_cast %97 : vector<1xf32> to vector<1x1xf32>
      %cst_35 = arith.constant 1.000000e+00 : f32
      %99 = vector.broadcast %cst_35 : f32 to vector<1x1xf32>
      %100 = arith.subf %99, %92 : vector<1x1xf32>
      %101 = arith.addf %100, %98 : vector<1x1xf32>
      %cst_36 = arith.constant 0.000000e+00 : f32
      %102 = vector.broadcast %cst_36 : f32 to vector<1x1xf32>
      %103 = arith.maximumf %102, %101 : vector<1x1xf32>
      %cst_37 = arith.constant 0.000000e+00 : f32
      %104 = vector.broadcast %cst_37 : f32 to vector<1x1xf32>
      %105 = arith.select %61, %103, %104 : vector<1x1xi1>, vector<1x1xf32>
      %cst_38 = arith.constant 1.000000e-01 : f32
      %106 = vector.broadcast %cst_38 : f32 to vector<1x1xf32>
      %107 = arith.mulf %106, %105 : vector<1x1xf32>
      %108 = arith.addf %86, %107 : vector<1x1xf32>
      %c0_39 = arith.constant 0 : index
      %c0_40 = arith.constant 0 : index
      %109 = vector.load %arg5[%c0_39, %c0_40] : memref<1x1xf32, #tpu.memory_space<vmem>>, vector<1x1xf32>
      tpu.vector_store %arg5[%c0_39, %c0_40], %108 {strides = array<i32>} : memref<1x1xf32, #tpu.memory_space<vmem>>, vector<1x1xf32>,
      %110 = arith.select %61, %59, %56 : vector<1x1xi1>, vector<1x1xf32>
      %111 = arith.addf %54, %110 : vector<1x1xf32>
      %112 = arith.fptosi %111 : vector<1x1xf32> to vector<1x1xi32>
      %c0_41 = arith.constant 0 : index
      %c0_42 = arith.constant 0 : index
      %113 = vector.load %arg6[%c0_41, %c0_42] : memref<1x1xi32, #tpu.memory_space<vmem>>, vector<1x1xi32>
      tpu.vector_store %arg6[%c0_41, %c0_42], %112 {strides = array<i32>} : memref<1x1xi32, #tpu.memory_space<vmem>>, vector<1x1xi32>,
    } else {
    }
    return
  }
  func.func @transform_0(%arg0: i32) -> (i32, i32) {
    %c0_i32 = arith.constant 0 : i32
    %c0_i32_0 = arith.constant 0 : i32
    %c0_i32_1 = arith.constant 0 : i32
    return %c0_i32, %c0_i32_0 : i32, i32
  }
  func.func @transform_1(%arg0: i32) -> (i32, i32) {
    %c0_i32 = arith.constant 0 : i32
    %c0_i32_0 = arith.constant 0 : i32
    %c0_i32_1 = arith.constant 0 : i32
    return %c0_i32, %c0_i32_0 : i32, i32
  }
  func.func @transform_2(%arg0: i32) -> (i32, i32) {
    %c0_i32 = arith.constant 0 : i32
    %c0_i32_0 = arith.constant 0 : i32
    return %c0_i32, %arg0 : i32, i32
  }
  func.func @transform_3(%arg0: i32) -> (i32, i32) {
    %c0_i32 = arith.constant 0 : i32
    %c0_i32_0 = arith.constant 0 : i32
    return %c0_i32, %arg0 : i32, i32
  }
  func.func @transform_4(%arg0: i32) -> (i32, i32) {
    %c0_i32 = arith.constant 0 : i32
    %c0_i32_0 = arith.constant 0 : i32
    %c0_i32_1 = arith.constant 0 : i32
    return %c0_i32, %c0_i32_0 : i32, i32
  }
  func.func @transform_5(%arg0: i32) -> (i32, i32) {
    %c0_i32 = arith.constant 0 : i32
    %c0_i32_0 = arith.constant 0 : i32
    %c0_i32_1 = arith.constant 0 : i32
    return %c0_i32, %c0_i32_0 : i32, i32
  }
}

</mosaic_0001>

<llo_original>
// kernel: actionness_loss.1
$region0: #{actionness_loss.1}
  #allocation0 [shape = 'u32[]', space=smem, size = 0x4, offset = 0x4, fixed_abs, tag = 'smem constant byte address 0x4 - core index']
  #allocation1 [shape = 'u32[144,128]{1,0:T(1,128)}', space=vmem, size = 0x12000, scoped, tag = 'internal scratch']
  #allocation2 [shape = 'f32[1,128]{1,0:T(1,128)}', space=vmem, size = 0x200, scoped, tag = 'scratch operand']
  %s0 = inlined_call_operand.hbm [shape: f32[1,128], index: 0, kind: input, shape index: {}, may-alias: {0,2}]
  %s1 = inlined_call_operand.hbm [shape: f32[1,128], index: 1, kind: input, shape index: {}, may-alias: {1,3}]
  %s2 = inlined_call_operand.hbm [shape: f32[1,128], index: 2, kind: input, shape index: {}, may-alias: {0,2}]
  %s3 = inlined_call_operand.hbm [shape: f32[1,128], index: 3, kind: input, shape index: {}, may-alias: {1,3}]
  %s4 = inlined_call_operand.hbm [shape: f32[1,1], index: 4, kind: output, shape index: {0}]
  %s5 = inlined_call_operand.hbm [shape: s32[1,1], index: 5, kind: output, shape index: {1}]
  %6 = xla_tuple %s4, %s5
  %s7 = sld [smem:[#allocation0]]
  $region58: #{actionness_loss.1} parent=0
    _
  %s9 = ssub.s32 1, %s7
  %s10 = scalar_select 0, %s9, %s7
  $region1: #{actionness_loss.1} parent=0
    #allocation3 [shape = 'u8[512]{0}', space=vmem, size = 0x400, scoped, tag = 'input window, operand 0, single buffered']
    #allocation4 [shape = 's32[1]{0}', space=sflag, size = 0x4, scoped, tag = 'scoped memory for actionness_loss.1']
    #allocation5 [shape = 's32[1]{0}', space=sflag, size = 0x4, scoped, tag = 'scoped memory for actionness_loss.1']
    #allocation6 [shape = 'u8[512]{0}', space=vmem, size = 0x400, scoped, tag = 'input window, operand 1, single buffered']
    #allocation7 [shape = 's32[1]{0}', space=sflag, size = 0x4, scoped, tag = 'scoped memory for actionness_loss.1']
    #allocation8 [shape = 'u8[512]{0}', space=vmem, size = 0x400, scoped, tag = 'input window, operand 2, single buffered']
    #allocation9 [shape = 'u8[512]{0}', space=vmem, size = 0x400, scoped, tag = 'input window, operand 3, single buffered']
    #allocation10 [shape = 's32[1]{0}', space=sflag, size = 0x4, scoped, tag = 'scoped memory for actionness_loss.1']
    #allocation11 [shape = 'u8[512]{0}', space=vmem, size = 0x400, scoped, tag = 'output window, operand 0, single buffered']
    #allocation12 [shape = 'u8[512]{0}', space=vmem, size = 0x400, scoped, tag = 'output window, operand 1, single buffered']
    #allocation13 [shape = 's32[1]{0}', space=sflag, size = 0x4, scoped, tag = 'scoped memory for actionness_loss.1']
    %11 = vsyncpa [#allocation4], 0
    %12 = vsyncpa [#allocation7], 0
    %13 = vsyncpa [#allocation10], 0
    %14 = vsyncpa [#allocation5], 0
    %15 = vsyncpa [#allocation13], 0
    // Predicated region
    $region2: #{actionness_loss.1} parent=1 // pred_check
      _
    $region3: #{actionness_loss.1} parent=1 // pred_check_branch
      %17 = sbr.rel (0) target = $region5
    $region4: #{actionness_loss.1} parent=1 // pred_region
      %s19 = ssub.s32 16, 16
      %20 = vsyncadd [#allocation4], %s19
      %s22 = sshll.u32 [#allocation3], 4
      %s23 = int_to_ptr.vmem [resolvable:$true] %s22
      %25 = dma.hbm_to_vmem [thread:$0]  %s0, 16, %s23, [#allocation4]
    $region5: #{actionness_loss.1} parent=1 // pred_fallthru
      _
    // Predicated region
    $region6: #{actionness_loss.1} parent=1 // pred_check
      _
    $region7: #{actionness_loss.1} parent=1 // pred_check_branch
      %27 = sbr.rel (0) target = $region9
    $region8: #{actionness_loss.1} parent=1 // pred_region
      %s29 = ssub.s32 16, 16
      %30 = vsyncadd [#allocation7], %s29
      %s32 = sshll.u32 [#allocation6], 4
      %s33 = int_to_ptr.vmem [resolvable:$true] %s32
      %35 = dma.hbm_to_vmem [thread:$0]  %s1, 16, %s33, [#allocation7]
    $region9: #{actionness_loss.1} parent=1 // pred_fallthru
      _
    // Predicated region
    $region10: #{actionness_loss.1} parent=1 // pred_check
      _
    $region11: #{actionness_loss.1} parent=1 // pred_check_branch
      %37 = sbr.rel (0) target = $region13
    $region12: #{actionness_loss.1} parent=1 // pred_region
      %s39 = ssub.s32 16, 16
      %40 = vsyncadd [#allocation7], %s39
      %s42 = sshll.u32 [#allocation8], 4
      %s43 = int_to_ptr.vmem [resolvable:$true] %s42
      %45 = dma.hbm_to_vmem [thread:$0]  %s2, 16, %s43, [#allocation7]
    $region13: #{actionness_loss.1} parent=1 // pred_fallthru
      _
    // Predicated region
    $region14: #{actionness_loss.1} parent=1 // pred_check
      _
    $region15: #{actionness_loss.1} parent=1 // pred_check_branch
      %47 = sbr.rel (0) target = $region17
    $region16: #{actionness_loss.1} parent=1 // pred_region
      %s49 = ssub.s32 16, 16
      %50 = vsyncadd [#allocation10], %s49
      %s52 = sshll.u32 [#allocation9], 4
      %s53 = int_to_ptr.vmem [resolvable:$true] %s52
      %55 = dma.hbm_to_vmem [thread:$0]  %s3, 16, %s53, [#allocation10]
    $region17: #{actionness_loss.1} parent=1 // pred_fallthru
      _
    // Predicated region
    $region18: #{actionness_loss.1} parent=1 // pred_check
      _
    $region19: #{actionness_loss.1} parent=1 // pred_check_branch
      %57 = sbr.rel (0) target = $region21
    $region20: #{actionness_loss.1} parent=1 // pred_region
      %58 = dma.done [#allocation4], 16
    $region21: #{actionness_loss.1} parent=1 // pred_fallthru
      _
    // Predicated region
    $region22: #{actionness_loss.1} parent=1 // pred_check
      _
    $region23: #{actionness_loss.1} parent=1 // pred_check_branch
      %60 = sbr.rel (0) target = $region25
    $region24: #{actionness_loss.1} parent=1 // pred_region
      %61 = dma.done [#allocation7], 16
    $region25: #{actionness_loss.1} parent=1 // pred_fallthru
      _
    // Predicated region
    $region26: #{actionness_loss.1} parent=1 // pred_check
      _
    $region27: #{actionness_loss.1} parent=1 // pred_check_branch
      %63 = sbr.rel (0) target = $region29
    $region28: #{actionness_loss.1} parent=1 // pred_region
      %64 = dma.done [#allocation7], 16
    $region29: #{actionness_loss.1} parent=1 // pred_fallthru
      _
    // Predicated region
    $region30: #{actionness_loss.1} parent=1 // pred_check
      _
    $region31: #{actionness_loss.1} parent=1 // pred_check_branch
      %66 = sbr.rel (0) target = $region33
    $region32: #{actionness_loss.1} parent=1 // pred_region
      %67 = dma.done [#allocation10], 16
    $region33: #{actionness_loss.1} parent=1 // pred_fallthru
      _
    %p68 = scmp.eq.s32.totalorder 0, 0
    // Predicated region
    $region34: #{actionness_loss.1} parent=1 // pred_check
      %p69 = pneg %p68
    $region35: #{actionness_loss.1} parent=1 // pred_check_branch
      %71 = sbr.rel (%p69) target = $region37
    $region36: #{actionness_loss.1} parent=1 // pred_region
      %72 = vst [vmem:[#allocation2] sm:$0x1] 0.0
    $region37: #{actionness_loss.1} parent=1 // pred_fallthru
      _
    %v73 = vld [vmem:[#allocation3] sm:$0x1]
    %v74 = vld [vmem:[#allocation8] sm:$0x1]
    %v75 = vld [vmem:[#allocation9] sm:$0x1]
    %v76 = vlaneseq
    %v77 = vshrl.u32 %v76, 7
    %v78 = vadd.s32 %v77, 8
    %v79 = vadd.s32 %v77, 16
    %v80 = vadd.s32 %v77, 24
    %v81 = vadd.s32 %v77, 32
    %v82 = vadd.s32 %v77, 40
    %v83 = vadd.s32 %v77, 48
    %v84 = vadd.s32 %v77, 56
    %v85 = vadd.s32 %v77, 64
    %v86 = vadd.s32 %v77, 72
    %v87 = vadd.s32 %v77, 80
    %v88 = vadd.s32 %v77, 88
    %v89 = vadd.s32 %v77, 96
    %v90 = vadd.s32 %v77, 104
    %v91 = vadd.s32 %v77, 112
    %v92 = vadd.s32 %v77, 120
    %v93 = vlaneseq
    %v94 = vand.u32 %v93, 127
    %vm95 = vcmp.eq.s32.totalorder %v77, %v94
    %vm96 = vcmp.eq.s32.totalorder %v78, %v94
    %vm97 = vcmp.eq.s32.totalorder %v79, %v94
    %vm98 = vcmp.eq.s32.totalorder %v80, %v94
    %vm99 = vcmp.eq.s32.totalorder %v81, %v94
    %vm100 = vcmp.eq.s32.totalorder %v82, %v94
    %vm101 = vcmp.eq.s32.totalorder %v83, %v94
    %vm102 = vcmp.eq.s32.totalorder %v84, %v94
    %vm103 = vcmp.eq.s32.totalorder %v85, %v94
    %vm104 = vcmp.eq.s32.totalorder %v86, %v94
    %vm105 = vcmp.eq.s32.totalorder %v87, %v94
    %vm106 = vcmp.eq.s32.totalorder %v88, %v94
    %vm107 = vcmp.eq.s32.totalorder %v89, %v94
    %vm108 = vcmp.eq.s32.totalorder %v90, %v94
    %vm109 = vcmp.eq.s32.totalorder %v91, %v94
    %vm110 = vcmp.eq.s32.totalorder %v92, %v94
    %v112 = vlaneseq
    %v113 = vshrl.u32 %v112, 7
    %v114 = vsub.s32 0, %v113
    %v115 = vrot.slane %v74, %v114
    %v117 = vsel %vm95, %v115, 0.0
    %v118 = vsel %vm96, %v115, 0.0
    %v119 = vsel %vm97, %v115, 0.0
    %v120 = vsel %vm98, %v115, 0.0
    %v121 = vsel %vm99, %v115, 0.0
    %v122 = vsel %vm100, %v115, 0.0
    %v123 = vsel %vm101, %v115, 0.0
    %v124 = vsel %vm102, %v115, 0.0
    %v125 = vsel %vm103, %v115, 0.0
    %v126 = vsel %vm104, %v115, 0.0
    %v127 = vsel %vm105, %v115, 0.0
    %v128 = vsel %vm106, %v115, 0.0
    %v129 = vsel %vm107, %v115, 0.0
    %v130 = vsel %vm108, %v115, 0.0
    %v131 = vsel %vm109, %v115, 0.0
    %v132 = vsel %vm110, %v115, 0.0
    %133 = vadd.xlane.f32.xlu0 %v117
    %v134 = vpop.xlane.xlu0 %133
    %135 = vadd.xlane.f32.xlu0 %v118
    %v136 = vpop.xlane.xlu0 %135
    %137 = vadd.xlane.f32.xlu0 %v119
    %v138 = vpop.xlane.xlu0 %137
    %139 = vadd.xlane.f32.xlu0 %v120
    %v140 = vpop.xlane.xlu0 %139
    %141 = vadd.xlane.f32.xlu0 %v121
    %v142 = vpop.xlane.xlu0 %141
    %143 = vadd.xlane.f32.xlu0 %v122
    %v144 = vpop.xlane.xlu0 %143
    %145 = vadd.xlane.f32.xlu0 %v123
    %v146 = vpop.xlane.xlu0 %145
    %147 = vadd.xlane.f32.xlu0 %v124
    %v148 = vpop.xlane.xlu0 %147
    %149 = vadd.xlane.f32.xlu0 %v125
    %v150 = vpop.xlane.xlu0 %149
    %151 = vadd.xlane.f32.xlu0 %v126
    %v152 = vpop.xlane.xlu0 %151
    %153 = vadd.xlane.f32.xlu0 %v127
    %v154 = vpop.xlane.xlu0 %153
    %155 = vadd.xlane.f32.xlu0 %v128
    %v156 = vpop.xlane.xlu0 %155
    %157 = vadd.xlane.f32.xlu0 %v129
    %v158 = vpop.xlane.xlu0 %157
    %159 = vadd.xlane.f32.xlu0 %v130
    %v160 = vpop.xlane.xlu0 %159
    %161 = vadd.xlane.f32.xlu0 %v131
    %v162 = vpop.xlane.xlu0 %161
    %163 = vadd.xlane.f32.xlu0 %v132
    %v164 = vpop.xlane.xlu0 %163
    %s165 = smul.u32 0, 128
    %v166 = vstv %s165
    %v167 = vadd.s32 %v166, %v77
    %v168 = vadd.s32 %v166, %v78
    %v169 = vadd.s32 %v166, %v79
    %v170 = vadd.s32 %v166, %v80
    %v171 = vadd.s32 %v166, %v81
    %v172 = vadd.s32 %v166, %v82
    %v173 = vadd.s32 %v166, %v83
    %v174 = vadd.s32 %v166, %v84
    %v175 = vadd.s32 %v166, %v85
    %v176 = vadd.s32 %v166, %v86
    %v177 = vadd.s32 %v166, %v87
    %v178 = vadd.s32 %v166, %v88
    %v179 = vadd.s32 %v166, %v89
    %v180 = vadd.s32 %v166, %v90
    %v181 = vadd.s32 %v166, %v91
    %v182 = vadd.s32 %v166, %v92
    %v184 = vlaneseq
    %v185 = vshrl.u32 %v184, 7
    %v186 = vsub.s32 0, %v185
    %v187 = vrot.slane %v73, %v186
    %vm189 = vcmp.lt.f32.partialorder %v134, %v187
    %vm190 = vcmp.lt.f32.partialorder %v136, %v187
    %vm191 = vcmp.lt.f32.partialorder %v138, %v187
    %vm192 = vcmp.lt.f32.partialorder %v140, %v187
    %vm193 = vcmp.lt.f32.partialorder %v142, %v187
    %vm194 = vcmp.lt.f32.partialorder %v144, %v187
    %vm195 = vcmp.lt.f32.partialorder %v146, %v187
    %vm196 = vcmp.lt.f32.partialorder %v148, %v187
    %vm197 = vcmp.lt.f32.partialorder %v150, %v187
    %vm198 = vcmp.lt.f32.partialorder %v152, %v187
    %vm199 = vcmp.lt.f32.partialorder %v154, %v187
    %vm200 = vcmp.lt.f32.partialorder %v156, %v187
    %vm201 = vcmp.lt.f32.partialorder %v158, %v187
    %vm202 = vcmp.lt.f32.partialorder %v160, %v187
    %vm203 = vcmp.lt.f32.partialorder %v162, %v187
    %vm204 = vcmp.lt.f32.partialorder %v164, %v187
    %vm205 = vcmp.eq.f32.partialorder %v134, %v187
    %vm206 = vcmp.eq.f32.partialorder %v136, %v187
    %vm207 = vcmp.eq.f32.partialorder %v138, %v187
    %vm208 = vcmp.eq.f32.partialorder %v140, %v187
    %vm209 = vcmp.eq.f32.partialorder %v142, %v187
    %vm210 = vcmp.eq.f32.partialorder %v144, %v187
    %vm211 = vcmp.eq.f32.partialorder %v146, %v187
    %vm212 = vcmp.eq.f32.partialorder %v148, %v187
    %vm213 = vcmp.eq.f32.partialorder %v150, %v187
    %vm214 = vcmp.eq.f32.partialorder %v152, %v187
    %vm215 = vcmp.eq.f32.partialorder %v154, %v187
    %vm216 = vcmp.eq.f32.partialorder %v156, %v187
    %vm217 = vcmp.eq.f32.partialorder %v158, %v187
    %vm218 = vcmp.eq.f32.partialorder %v160, %v187
    %vm219 = vcmp.eq.f32.partialorder %v162, %v187
    %vm220 = vcmp.eq.f32.partialorder %v164, %v187
    %vm221 = vcmp.lt.s32.totalorder %v167, %v94
    %vm222 = vcmp.lt.s32.totalorder %v168, %v94
    %vm223 = vcmp.lt.s32.totalorder %v169, %v94
    %vm224 = vcmp.lt.s32.totalorder %v170, %v94
    %vm225 = vcmp.lt.s32.totalorder %v171, %v94
    %vm226 = vcmp.lt.s32.totalorder %v172, %v94
    %vm227 = vcmp.lt.s32.totalorder %v173, %v94
    %vm228 = vcmp.lt.s32.totalorder %v174, %v94
    %vm229 = vcmp.lt.s32.totalorder %v175, %v94
    %vm230 = vcmp.lt.s32.totalorder %v176, %v94
    %vm231 = vcmp.lt.s32.totalorder %v177, %v94
    %vm232 = vcmp.lt.s32.totalorder %v178, %v94
    %vm233 = vcmp.lt.s32.totalorder %v179, %v94
    %vm234 = vcmp.lt.s32.totalorder %v180, %v94
    %vm235 = vcmp.lt.s32.totalorder %v181, %v94
    %vm236 = vcmp.lt.s32.totalorder %v182, %v94
    %vm237 = vmand %vm205, %vm221
    %vm238 = vmand %vm206, %vm222
    %vm239 = vmand %vm207, %vm223
    %vm240 = vmand %vm208, %vm224
    %vm241 = vmand %vm209, %vm225
    %vm242 = vmand %vm210, %vm226
    %vm243 = vmand %vm211, %vm227
    %vm244 = vmand %vm212, %vm228
    %vm245 = vmand %vm213, %vm229
    %vm246 = vmand %vm214, %vm230
    %vm247 = vmand %vm215, %vm231
    %vm248 = vmand %vm216, %vm232
    %vm249 = vmand %vm217, %vm233
    %vm250 = vmand %vm218, %vm234
    %vm251 = vmand %vm219, %vm235
    %vm252 = vmand %vm220, %vm236
    %vm253 = vmor %vm189, %vm237
    %vm254 = vmor %vm190, %vm238
    %vm255 = vmor %vm191, %vm239
    %vm256 = vmor %vm192, %vm240
    %vm257 = vmor %vm193, %vm241
    %vm258 = vmor %vm194, %vm242
    %vm259 = vmor %vm195, %vm243
    %vm260 = vmor %vm196, %vm244
    %vm261 = vmor %vm197, %vm245
    %vm262 = vmor %vm198, %vm246
    %vm263 = vmor %vm199, %vm247
    %vm264 = vmor %vm200, %vm248
    %vm265 = vmor %vm201, %vm249
    %vm266 = vmor %vm202, %vm250
    %vm267 = vmor %vm203, %vm251
    %vm268 = vmor %vm204, %vm252
    %vm269 = vcmp.eq.f32.partialorder %v75, 0.0
    %v270 = vsel %vm269, 1, 0
    %v271 = vcvt.s32.f32 %v270
    %v272 = vld [vmem:[#allocation2] sm:$0x1]
    %v273 = vsel %vm253, 1, 0
    %v274 = vsel %vm254, 1, 0
    %v275 = vsel %vm255, 1, 0
    %v276 = vsel %vm256, 1, 0
    %v277 = vsel %vm257, 1, 0
    %v278 = vsel %vm258, 1, 0
    %v279 = vsel %vm259, 1, 0
    %v280 = vsel %vm260, 1, 0
    %v281 = vsel %vm261, 1, 0
    %v282 = vsel %vm262, 1, 0
    %v283 = vsel %vm263, 1, 0
    %v284 = vsel %vm264, 1, 0
    %v285 = vsel %vm265, 1, 0
    %v286 = vsel %vm266, 1, 0
    %v287 = vsel %vm267, 1, 0
    %v288 = vsel %vm268, 1, 0
    %v289 = vcvt.s32.f32 %v273
    %v290 = vcvt.s32.f32 %v274
    %v291 = vcvt.s32.f32 %v275
    %v292 = vcvt.s32.f32 %v276
    %v293 = vcvt.s32.f32 %v277
    %v294 = vcvt.s32.f32 %v278
    %v295 = vcvt.s32.f32 %v279
    %v296 = vcvt.s32.f32 %v280
    %v297 = vcvt.s32.f32 %v281
    %v298 = vcvt.s32.f32 %v282
    %v299 = vcvt.s32.f32 %v283
    %v300 = vcvt.s32.f32 %v284
    %v301 = vcvt.s32.f32 %v285
    %v302 = vcvt.s32.f32 %v286
    %v303 = vcvt.s32.f32 %v287
    %v304 = vcvt.s32.f32 %v288
    %305 = vmatprep.subr.mxu0 0.0
    %306 = vmatpush1.msra.mxu0 %v289
    %307 = vmatprep.subr.mxu0 0.0
    %308 = vmatpush1.msra.mxu0 %v290
    %309 = vmatprep.subr.mxu0 0.0
    %310 = vmatpush1.msra.mxu0 %v291
    %311 = vmatprep.subr.mxu0 0.0
    %312 = vmatpush1.msra.mxu0 %v292
    %313 = vmatprep.subr.mxu0 0.0
    %314 = vmatpush1.msra.mxu0 %v293
    %315 = vmatprep.subr.mxu0 0.0
    %316 = vmatpush1.msra.mxu0 %v294
    %317 = vmatprep.subr.mxu0 0.0
    %318 = vmatpush1.msra.mxu0 %v295
    %319 = vmatprep.subr.mxu0 0.0
    %320 = vmatpush1.msra.mxu0 %v296
    %321 = vmatprep.subr.mxu0 0.0
    %322 = vmatpush1.msra.mxu0 %v297
    %323 = vmatprep.subr.mxu0 0.0
    %324 = vmatpush1.msra.mxu0 %v298
    %325 = vmatprep.subr.mxu0 0.0
    %326 = vmatpush1.msra.mxu0 %v299
    %327 = vmatprep.subr.mxu0 0.0
    %328 = vmatpush1.msra.mxu0 %v300
    %329 = vmatprep.subr.mxu0 0.0
    %330 = vmatpush1.msra.mxu0 %v301
    %331 = vmatprep.subr.mxu0 0.0
    %332 = vmatpush1.msra.mxu0 %v302
    %333 = vmatprep.subr.mxu0 0.0
    %334 = vmatpush1.msra.mxu0 %v303
    %335 = vmatprep.subr.mxu0 0.0
    %336 = vmatpush1.msra.mxu0 %v304
    %337 = vmatprep.subr.mxu0 0.0
    %338 = vmatpush1.msra.mxu0 0.0
    %339 = vmatprep.subr.mxu0 0.0
    %340 = vmatpush1.msra.mxu0 0.0
    %341 = vmatprep.subr.mxu0 0.0
    %342 = vmatpush1.msra.mxu0 0.0
    %343 = vmatprep.subr.mxu0 0.0
    %344 = vmatpush1.msra.mxu0 0.0
    %345 = vmatprep.subr.mxu0 0.0
    %346 = vmatpush1.msra.mxu0 0.0
    %347 = vmatprep.subr.mxu0 0.0
    %348 = vmatpush1.msra.mxu0 0.0
    %349 = vmatprep.subr.mxu0 0.0
    %350 = vmatpush1.msra.mxu0 0.0
    %351 = vmatprep.subr.mxu0 0.0
    %352 = vmatpush1.msra.mxu0 0.0
    %353 = vmatprep.subr.mxu0 0.0
    %354 = vmatpush1.msra.mxu0 0.0
    %355 = vmatprep.subr.mxu0 0.0
    %356 = vmatpush1.msra.mxu0 0.0
    %357 = vmatprep.subr.mxu0 0.0
    %358 = vmatpush1.msra.mxu0 0.0
    %359 = vmatprep.subr.mxu0 0.0
    %360 = vmatpush1.msra.mxu0 0.0
    %361 = vmatprep.subr.mxu0 0.0
    %362 = vmatpush1.msra.mxu0 0.0
    %363 = vmatprep.subr.mxu0 0.0
    %364 = vmatpush1.msra.mxu0 0.0
    %365 = vmatprep.subr.mxu0 0.0
    %366 = vmatpush1.msra.mxu0 0.0
    %367 = vmatprep.subr.mxu0 0.0
    %368 = vmatpush1.msra.mxu0 0.0
    %369 = vmatprep.mubr.f32.mxu0 0.0
    %370 = vmatmul.mubr.f32.gmra.mrb[0].mxu0 %v271
    %v371 = vpop.f32.mrb[0].mxu0
    %v372 = vadd.f32 0.0, %v371
    %v373 = vpop.f32.mrb[0].mxu0
    %374 = vdwg.mxu0
    %v375 = vadd.f32 %v272, %v372
    %376 = vst [vmem:[#allocation2] sm:$0x1] %v375
    // Predicated region
    $region38: #{actionness_loss.1} parent=1 // pred_check
      %p377 = pneg %p68
    $region39: #{actionness_loss.1} parent=1 // pred_check_branch
      %379 = sbr.rel (%p377) target = $region41
    $region40: #{actionness_loss.1} parent=1 // pred_region
      %v380 = vld [vmem:[#allocation6] sm:$0x1]
      %vm381 = vcmp.gt.f32.partialorder %v380, 0.0
      %v382 = vsel %vm381, 1, 0
      %v383 = vcvt.s32.f32 %v382
      %vm384 = vcmp.eq.f32.partialorder %v380, 0.0
      %v385 = vsel %vm384, 1, 0
      %v386 = vcvt.s32.f32 %v385
      %vm387 = vcmask 1040384
      %v388 = vsel %vm387, %v383, 0.0
      %389 = vadd.xlane.f32.xlu0 %v388
      %v390 = vpop.xlane.xlu0 %389
      %v391 = vsel %vm387, %v386, 0.0
      %392 = vadd.xlane.f32.xlu0 %v391
      %v393 = vpop.xlane.xlu0 %392
      %v394 = vmin.f32 %v390, %v393
      %v395 = vsub.f32 %v394, 1.0
      %vm396 = vcmp.gt.f32.partialorder %v395, 0.0
      %v397 = vld [vmem:[#allocation2] sm:$0x1]
      %vm398 = vcmp.lt.f32.partialorder %v397, %v395
      %v399 = vsel %vm398, 1, 0
      %v400 = vcvt.s32.f32 %v399
      %v401 = vmul.f32 %v386, %v400
      %v402 = vsel %vm396, 1, 0
      %vm403 = vcmp.eq.s32.totalorder %v402, 1
      %v404 = vsel %vm403, %v401, %v386
      %v405 = vadd.f32 %v383, %v404
      %v406 = vmax.f32 %v73, 0.0
      %v407 = vmul.f32 %v73, %v380
      %v408 = vsub.f32 %v406, %v407
      %v409 = vand.u32 2147483647, %v73
      %v410 = vsub.f32 0.0, %v409
      %v411 = vmul.f32 %v410, 1.442695
      %v412 = vpow.pop %v411
      %v413 = vadd.f32 %v412, 1.0
      %v414 = vlog2.pop %v413
      %v415 = vmul.f32 %v414, 0.6931472
      %v416 = vadd.f32 %v408, %v415
      %v417 = vmul.f32 %v405, %v416
      %v418 = vsel %vm387, %v417, 0.0
      %419 = vadd.xlane.f32.xlu0 %v418
      %v420 = vpop.xlane.xlu0 %419
      %vm421 = vcmp.gt.f32.partialorder %v386, 0.0
      %v422 = vsel %vm421, %v73, -inf
      %v423 = vsel %vm387, %v422, -inf
      %424 = vmax.xlane.f32.xlu0 %v423
      %v425 = vpop.xlane.xlu0 %424
      %vm426 = vcmp.gt.f32.partialorder %v383, 0.0
      %v427 = vsel %vm426, %v73, -inf
      %v428 = vsel %vm387, %v427, -inf
      %429 = vmax.xlane.f32.xlu0 %v428
      %v430 = vpop.xlane.xlu0 %429
      %v431 = vsub.f32 1.0, %v425
      %v432 = vadd.f32 %v431, %v430
      %v433 = vmax.f32 %v432, 0.0
      %v434 = vsel %vm396, %v433, 0.0
      %v435 = vmul.f32 %v434, 0.1
      %v436 = vadd.f32 %v420, %v435
      %vm437 = vcmask 0
      %438 = vst.msk [vmem:[#allocation11] sm:$0x1] %vm437, %v436
      %v439 = vsel %vm396, %v395, %v393
      %v440 = vadd.f32 %v390, %v439
      %v441 = vcvt.f32.s32.to.zero.pseudo %v440
      %442 = vst.msk [vmem:[#allocation12] sm:$0x1] %vm437, %v441
    $region41: #{actionness_loss.1} parent=1 // pred_fallthru
      _
    // Predicated region
    $region42: #{actionness_loss.1} parent=1 // pred_check
      _
    $region43: #{actionness_loss.1} parent=1 // pred_check_branch
      %444 = sbr.rel (0) target = $region45
    $region44: #{actionness_loss.1} parent=1 // pred_region
      %s446 = ssub.s32 16, 16
      %447 = vsyncadd [#allocation5], %s446
      %s449 = sshll.u32 [#allocation11], 4
      %s450 = int_to_ptr.vmem [resolvable:$true] %s449
      %452 = dma.vmem_to_hbm [thread:$0]  %s450, 16, %s4, [#allocation5]
    $region45: #{actionness_loss.1} parent=1 // pred_fallthru
      _
    // Predicated region
    $region46: #{actionness_loss.1} parent=1 // pred_check
      _
    $region47: #{actionness_loss.1} parent=1 // pred_check_branch
      %454 = sbr.rel (0) target = $region49
    $region48: #{actionness_loss.1} parent=1 // pred_region
      %s456 = ssub.s32 16, 16
      %457 = vsyncadd [#allocation13], %s456
      %s459 = sshll.u32 [#allocation12], 4
      %s460 = int_to_ptr.vmem [resolvable:$true] %s459
      %462 = dma.vmem_to_hbm [thread:$0]  %s460, 16, %s5, [#allocation13]
    $region49: #{actionness_loss.1} parent=1 // pred_fallthru
      _
    // Predicated region
    $region50: #{actionness_loss.1} parent=1 // pred_check
      _
    $region51: #{actionness_loss.1} parent=1 // pred_check_branch
      %464 = sbr.rel (0) target = $region53
    $region52: #{actionness_loss.1} parent=1 // pred_region
      %465 = dma.done [#allocation5], 16
    $region53: #{actionness_loss.1} parent=1 // pred_fallthru
      _
    // Predicated region
    $region54: #{actionness_loss.1} parent=1 // pred_check
      _
    $region55: #{actionness_loss.1} parent=1 // pred_check_branch
      %467 = sbr.rel (0) target = $region57
    $region56: #{actionness_loss.1} parent=1 // pred_region
      %468 = dma.done [#allocation13], 16
    $region57: #{actionness_loss.1} parent=1 // pred_fallthru
      _
    %469 = vsyncpa [#allocation4], 1
    %470 = vsyncpa [#allocation7], 1
    %471 = vsyncpa [#allocation10], 1
    %472 = vsyncpa [#allocation5], 1
    %473 = vsyncpa [#allocation13], 1

</llo_original>
